<compile_context>
chip_gen: v7x
topology: tpu7x:2x2x1
jax: 0.10.0
libtpu: 0.0.40
codegen_flags: <defaults>
</compile_context>

<pallas_src>
import math
import jax
import jax.numpy as jnp
from jax import lax
from jax.experimental import pallas as pl
from jax.experimental.pallas import tpu as pltpu


def _cdiv(a, b):
    return (a + b - 1) // b


def _round_up(x, m):
    return _cdiv(x, m) * m


def _pick_tile(M, target):
    """Lane-multiple tile along M: <= target, >= 128, and (when M allows)
    yielding at least 2 grid blocks so the v7x megacore has parallel work."""
    half = _round_up(max(_cdiv(M, 2), 128), 128)
    return max(128, min(target, half))


_VMEM_LIMIT = 48 * 1024 * 1024  # explicit scoped-VMEM limit (v5e default is 16 MiB)


# ----------------------------------------------------------------------------
# Pallas kernel 1: feature extractor (3x3 conv, padding=1, bias) as a single
# im2col MXU matmul:  out[co, m] = sum_k w[co, k] * patches[k, m] + b[co]
# with K = 9*Cin and m (= n*H*W row index) tiled along the lane axis.
# Output is stored bf16 (f32 accumulate) -> half the HBM feature traffic.
# ----------------------------------------------------------------------------
def _conv_mm_kernel(p_ref, w_ref, b_ref, o_ref):
    # p_ref: (K, tile_m)    bf16  im2col patches (channel-major, lane-dense)
    # w_ref: (Cout, K)      bf16  flattened conv weight (resident across grid)
    # b_ref: (Cout, 1)      f32   bias
    # o_ref: (Cout, tile_m) bf16  lane-dense output block
    acc = jnp.dot(w_ref[...], p_ref[...], preferred_element_type=jnp.float32)
    o_ref[...] = (acc + b_ref[...]).astype(o_ref.dtype)


def conv3x3_cm(x_nchw, w_hwio, b, *, tile_m=1024):
    """3x3 conv, padding=1, stride 1, bias.
    x_nchw: (N, Cin, H, W) f32;  w_hwio: (3,3,Cin,Cout);  b: (Cout,).
    Returns CHANNEL-MAJOR bf16 features of shape (Cout, N, H, W)."""
    N, Cin, H, W = x_nchw.shape
    Cout = w_hwio.shape[-1]
    K = 9 * Cin
    M = N * H * W
    tile_m = _pick_tile(M, tile_m)
    Mp = _round_up(M, tile_m)

    # im2col built directly in (K, M) channel-major layout: cast to bf16 BEFORE
    # the 9x expansion, transpose only the un-expanded input once.
    xb = x_nchw.astype(jnp.bfloat16)
    xt = jnp.transpose(xb, (1, 0, 2, 3))                    # (Cin, N, H, W)
    x_pad = jnp.pad(xt, ((0, 0), (0, 0), (1, 1), (1, 1)))   # (Cin, N, Hp, Wp)
    patches = jnp.concatenate(
        [x_pad[:, :, ky:ky + H, kx:kx + W]
         for ky in range(3) for kx in range(3)], axis=0)    # (9*Cin, N, H, W)
    patches = patches.reshape(K, M)                         # K order: (ky,kx,c)
    if Mp != M:
        patches = jnp.pad(patches, ((0, 0), (0, Mp - M)))

    w_t = w_hwio.reshape(K, Cout).T.astype(jnp.bfloat16)    # (Cout, K), (ky,kx,c)
    b2 = b.reshape(Cout, 1).astype(jnp.float32)

    out = pl.pallas_call(
        _conv_mm_kernel,
        out_shape=jax.ShapeDtypeStruct((Cout, Mp), jnp.bfloat16),
        grid=(Mp // tile_m,),
        in_specs=[
            pl.BlockSpec((K, tile_m), lambda i: (0, i)),
            pl.BlockSpec((Cout, K), lambda i: (0, 0)),
            pl.BlockSpec((Cout, 1), lambda i: (0, 0)),
        ],
        out_specs=pl.BlockSpec((Cout, tile_m), lambda i: (0, i)),
        compiler_params=pltpu.CompilerParams(
            dimension_semantics=("parallel",),
            vmem_limit_bytes=_VMEM_LIMIT),
    )(patches, w_t, b2)
    # keep the output channel-major for downstream code (no NHWC transpose)
    return out[:, :M].reshape(Cout, N, H, W)


# ----------------------------------------------------------------------------
# Pallas kernel 2: classifier (filter_layer.apply_filter).  Grid is
# (n_seq, m_tiles); each step contracts BOTH filter iterates (n_iter, K)
# against a lane-dense (K, tile_m) patch tile, K = fH*fW*C fills the MXU depth.
# ----------------------------------------------------------------------------
def _apply_filter_kernel(p_ref, f_ref, o_ref):
    # p_ref: (K, tile_m)      bf16  im2col test patches (this seq, this M tile)
    # f_ref: (n_iter, K)      bf16  all filter iterates for this sequence
    # o_ref: (n_iter, tile_m) f32   scores
    o_ref[...] = jnp.dot(f_ref[...], p_ref[...],
                         preferred_element_type=jnp.float32)


def apply_filters_pallas(te_f_cm, filter_iter, filter_size, *, tile_m=1024):
    """te_f_cm: (C, n_img, n_seq, H, W) bf16 channel-major test features.
    filter_iter: list of (n_seq, C, fH, fW) filter iterates.
    Returns scores (n_iter, n_img, n_seq, Ho, Wo) f32 (correlation, pad=fs//2)."""
    C, n_img, n_seq, H, W = te_f_cm.shape
    fH = fW = filter_size
    pad = filter_size // 2
    Ho = H + 2 * pad - fH + 1
    Wo = W + 2 * pad - fW + 1
    n_iter = len(filter_iter)
    K = fH * fW * C
    M = n_img * Ho * Wo
    tile_m = _pick_tile(M, tile_m)
    Mp = _round_up(M, tile_m)

    # Wrapper glue: ONE transpose of the un-inflated feature tensor to
    # (n_seq, C, n_img, H, W); taps are then concatenated C-major along axis 1
    # -> the (n_seq, K, M) slab is built with no transpose of the 16x-inflated
    # tensor.  Tap order: (dy, dx, c), matching the filter flattening below.
    te_sm = jnp.transpose(te_f_cm, (2, 0, 1, 3, 4))          # (n_seq,C,n_img,H,W)
    te_pad = jnp.pad(te_sm, ((0, 0), (0, 0), (0, 0), (pad, pad), (pad, pad)))
    patches = jnp.concatenate(
        [te_pad[:, :, :, dy:dy + Ho, dx:dx + Wo]
         for dy in range(fH) for dx in range(fW)], axis=1)   # (n_seq,K,n_img,Ho,Wo)
    patches = patches.reshape(n_seq, K, M)
    if Mp != M:                                              # lane-dense padding
        patches = jnp.pad(patches, ((0, 0), (0, 0), (0, Mp - M)))

    filt = jnp.stack(filter_iter, axis=1)                    # (n_seq,n_iter,C,fH,fW)
    filt = jnp.transpose(filt, (0, 1, 3, 4, 2)).reshape(n_seq, n_iter, K)
    filt = filt.astype(jnp.bfloat16)

    m_tiles = Mp // tile_m
    out = pl.pallas_call(
        _apply_filter_kernel,
        out_shape=jax.ShapeDtypeStruct((n_seq, n_iter, Mp), jnp.float32),
        grid=(n_seq, m_tiles),
        in_specs=[
            pl.BlockSpec((None, K, tile_m), lambda s, m: (s, 0, m)),
            pl.BlockSpec((None, n_iter, K), lambda s, m: (s, 0, 0)),
        ],
        out_specs=pl.BlockSpec((None, n_iter, tile_m), lambda s, m: (s, 0, m)),
        compiler_params=pltpu.CompilerParams(
            dimension_semantics=("parallel", "parallel"),
            vmem_limit_bytes=_VMEM_LIMIT),
    )(patches, filt)

    out = out[:, :, :M].reshape(n_seq, n_iter, n_img, Ho, Wo)  # drop padded cols
    return jnp.transpose(out, (1, 2, 0, 3, 4))               # (n_iter,n_img,n_seq,Ho,Wo)


# ----------------------------------------------------------------------------
# Filter "optimizer" (glue): the original module delegates to an injected
# filter_optimizer.  Here: crop a filter_size x filter_size patch of the train
# classification features centered on the box center (feature stride 1),
# average over train images -> initial filter; emit 2 iterates.
# TODO(synk): the real filter_optimizer (e.g. DiMP steepest-descent) is an
# external injected module and is replaced by this deterministic initializer.
# ----------------------------------------------------------------------------
def simple_filter_iterates(train_feat_cm, train_bb, filter_size):
    """train_feat_cm: (C, n_img, n_seq, H, W); train_bb: (n_img, n_seq, 4)."""
    C, n_img, n_seq, H, W = train_feat_cm.shape

    def crop_one(feat_chw, bb):
        cx = bb[0] + 0.5 * bb[2]
        cy = bb[1] + 0.5 * bb[3]
        x0 = jnp.clip(jnp.round(cx).astype(jnp.int32) - filter_size // 2,
                      0, W - filter_size)
        y0 = jnp.clip(jnp.round(cy).astype(jnp.int32) - filter_size // 2,
                      0, H - filter_size)
        return lax.dynamic_slice(feat_chw, (0, y0, x0),
                                 (C, filter_size, filter_size))

    crops = jax.vmap(jax.vmap(crop_one, in_axes=(1, 0)),
                     in_axes=(1, 0))(train_feat_cm, train_bb)  # (n_img,n_seq,C,fH,fW)
    w0 = crops.astype(jnp.float32).mean(axis=0)                # (n_seq,C,fH,fW)
    return [w0, 0.5 * w0]


# ----------------------------------------------------------------------------
# Full forward, matching GRUFilter.forward semantics.
# ----------------------------------------------------------------------------
def gru_filter_forward(train_feat, test_feat, train_bb, params, filter_size):
    """train_feat/test_feat: (n_img, n_seq, Cin, H, W) NCHW (PyTorch layout).
    train_bb: (n_img, n_seq, 4) as (x, y, w, h).
    Returns list of score maps, each (n_test, n_seq, Ho, Wo)."""
    assert train_bb.ndim == 3
    n_train, n_seq = train_feat.shape[0], train_feat.shape[1]
    n_test = test_feat.shape[0]
    Cin, H, W = train_feat.shape[2:]

    tr = train_feat.reshape(-1, Cin, H, W)
    te = test_feat.reshape(-1, Cin, H, W)

    # feature extractor (Pallas im2col matmul), channel-major bf16 features
    cw, cb = params["conv_w"], params["conv_b"]
    tr_f = conv3x3_cm(tr, cw, cb).reshape(-1, n_train, n_seq, H, W)  # (C,nt,ns,H,W)
    te_f = conv3x3_cm(te, cw, cb).reshape(-1, n_test, n_seq, H, W)

    # filter optimizer -> iterates of (n_seq, C, fH, fW)
    filter_iter = simple_filter_iterates(tr_f, train_bb, filter_size)

    # classify every iterate on every test image (M-tiled Pallas matmul)
    scores_all = apply_filters_pallas(te_f, filter_iter, filter_size)
    return [scores_all[i] for i in range(len(filter_iter))]


# ----------------------------------------------------------------------------
# Pure-JAX reference (same numerics policy: bf16 MXU operands, f32 accumulate,
# bf16 feature storage).
# ----------------------------------------------------------------------------
def _ref_forward(train_feat, test_feat, train_bb, params, filter_size):
    n_train, n_seq = train_feat.shape[0], train_feat.shape[1]
    n_test = test_feat.shape[0]
    Cin, H, W = train_feat.shape[2:]
    tr = jnp.transpose(train_feat.reshape(-1, Cin, H, W), (0, 2, 3, 1))
    te = jnp.transpose(test_feat.reshape(-1, Cin, H, W), (0, 2, 3, 1))
    cw, cb = params["conv_w"], params["conv_b"]
    dn = ("NHWC", "HWIO", "NHWC")

    def conv(x):
        y = lax.conv_general_dilated(
            x.astype(jnp.bfloat16), cw.astype(jnp.bfloat16), (1, 1),
            ((1, 1), (1, 1)), dimension_numbers=dn,
            preferred_element_type=jnp.float32)
        return (y + cb[None, None, None, :]).astype(jnp.bfloat16)  # bf16 features

    tr_f = conv(tr).reshape(n_train, n_seq, H, W, -1)   # NHWC bf16
    te_f = conv(te).reshape(n_test, n_seq, H, W, -1)
    tr_f_cm = jnp.transpose(tr_f, (4, 0, 1, 2, 3))      # (C, n_train, n_seq, H, W)
    filter_iter = simple_filter_iterates(tr_f_cm, train_bb, filter_size)

    pad = filter_size // 2
    outs = []
    for f in filter_iter:                               # f: (n_seq, C, fH, fW)
        per_seq = []
        for s in range(n_seq):
            k = jnp.transpose(f[s], (1, 2, 0)).astype(jnp.bfloat16)[..., None]
            y = lax.conv_general_dilated(
                te_f[:, s], k, (1, 1),
                ((pad, pad), (pad, pad)), dimension_numbers=dn,
                preferred_element_type=jnp.float32)     # (n_test, Ho, Wo, 1)
            per_seq.append(y[..., 0])
        outs.append(jnp.stack(per_seq, axis=1))
    return outs


if __name__ == "__main__":
    key = jax.random.PRNGKey(0)
    # Small shapes consistent with the module's forward.
    n_train, n_test, n_seq = 2, 2, 2
    Cin, H, W = 8, 16, 16
    feat_dim = 16
    filter_size = 4

    k1, k2, k3, k4 = jax.random.split(key, 4)
    train_feat = jax.random.normal(k1, (n_train, n_seq, Cin, H, W), jnp.float32)
    test_feat = jax.random.normal(k2, (n_test, n_seq, Cin, H, W), jnp.float32)
    # boxes (x, y, w, h) in feature/image coords
    xy = jax.random.uniform(k3, (n_train, n_seq, 2), minval=2.0, maxval=8.0)
    wh = jax.random.uniform(k4, (n_train, n_seq, 2), minval=3.0, maxval=6.0)
    train_bb = jnp.concatenate([xy, wh], axis=-1)

    # Deterministic parameter init mirroring the module's __init__:
    # Conv2d weight ~ N(0, sqrt(2 / (k*k*out_channels))), bias = 0.
    n_fan = 3 * 3 * feat_dim
    conv_w = (jax.random.normal(jax.random.PRNGKey(42), (3, 3, Cin, feat_dim),
                                jnp.float32) * math.sqrt(2.0 / n_fan))
    conv_b = jnp.zeros((feat_dim,), jnp.float32)
    params = {"conv_w": conv_w, "conv_b": conv_b}

    scores = gru_filter_forward(train_feat, test_feat, train_bb, params,
                                filter_size)
    scores = [jax.block_until_ready(s) for s in scores]

    # Per-kernel check of the conv (both paths: bf16 operands, f32 accumulate,
    # bf16 store -> only accumulation-order / last-ulp rounding differences).
    te_nchw = test_feat.reshape(-1, Cin, H, W)
    conv_p = conv3x3_cm(te_nchw, conv_w, conv_b).astype(jnp.float32)
    te_nhwc = jnp.transpose(te_nchw, (0, 2, 3, 1))
    conv_r = lax.conv_general_dilated(
        te_nhwc.astype(jnp.bfloat16), conv_w.astype(jnp.bfloat16), (1, 1),
        ((1, 1), (1, 1)), dimension_numbers=("NHWC", "HWIO", "NHWC"),
        preferred_element_type=jnp.float32) + conv_b[None, None, None, :]
    conv_r_cm = jnp.transpose(conv_r, (3, 0, 1, 2)).astype(jnp.bfloat16)
    cmax = float(jnp.max(jnp.abs(conv_r)))
    cerr = float(jnp.max(jnp.abs(conv_p - conv_r_cm.astype(jnp.float32))))
    assert cerr <= 1e-2 * max(1.0, cmax), f"conv max abs err {cerr}"

    # End-to-end check against the pure-JAX reference with the same bf16
    # feature-storage policy; remaining differences are accumulation order and
    # rare 1-ulp bf16 roundings, far below 1% of the score range.
    refs = _ref_forward(train_feat, test_feat, train_bb, params, filter_size)
    for s, r in zip(scores, refs):
        assert s.shape == r.shape, (s.shape, r.shape)
        absmax = float(jnp.max(jnp.abs(r)))
        err = float(jnp.max(jnp.abs(s - r)))
        assert err <= 1e-2 * max(1.0, absmax), \
            f"max abs err {err} (score absmax {absmax})"

    print("KERNEL_OK")
</pallas_src>

<mosaic_0001>
module attributes {stable_mosaic.version = 11 : i64} {
  func.func @_conv_mm_kernel(%arg0: i32, %arg1: memref<72x512xbf16, #tpu.memory_space<vmem>>, %arg2: memref<16x72xbf16, #tpu.memory_space<vmem>>, %arg3: memref<16x1xf32, #tpu.memory_space<vmem>>, %arg4: memref<16x512xbf16, #tpu.memory_space<vmem>>) attributes {dimension_semantics = [#tpu.dimension_semantics<parallel>], iteration_bounds = array<i64: 2>, scalar_prefetch = 0 : i64, scratch_operands = 0 : i64, tpu.core_type = #tpu.core_type<tc>, window_params = [{transform_indices = @transform_0, window_bounds = array<i64: 72, 512>}, {pipeline_mode = #tpu.pipeline_mode<synchronous>, transform_indices = @transform_1, window_bounds = array<i64: 16, 72>}, {pipeline_mode = #tpu.pipeline_mode<synchronous>, transform_indices = @transform_2, window_bounds = array<i64: 16, 1>}, {transform_indices = @transform_3, window_bounds = array<i64: 16, 512>}]} {
    %c0 = arith.constant 0 : index
    %c0_0 = arith.constant 0 : index
    %0 = vector.load %arg2[%c0, %c0_0] : memref<16x72xbf16, #tpu.memory_space<vmem>>, vector<16x72xbf16>
    %c0_1 = arith.constant 0 : index
    %c0_2 = arith.constant 0 : index
    %1 = vector.load %arg1[%c0_1, %c0_2] : memref<72x512xbf16, #tpu.memory_space<vmem>>, vector<72x512xbf16>
    %cst = arith.constant dense<0.000000e+00> : vector<16x512xf32>
    %2 = tpu.matmul %0, %1, %cst {dimension_numbers = #tpu.dot_dimension_numbers<[1], [0], [0], [1], [0, 0, 1, 1], [], []>} : vector<16x72xbf16>, vector<72x512xbf16>, vector<16x512xf32> -> vector<16x512xf32>
    %c0_3 = arith.constant 0 : index
    %c0_4 = arith.constant 0 : index
    %3 = vector.load %arg3[%c0_3, %c0_4] : memref<16x1xf32, #tpu.memory_space<vmem>>, vector<16x1xf32>
    %4 = vector.broadcast %3 : vector<16x1xf32> to vector<16x512xf32>
    %5 = arith.addf %2, %4 : vector<16x512xf32>
    %6 = arith.truncf %5 : vector<16x512xf32> to vector<16x512xbf16>
    %c0_5 = arith.constant 0 : index
    %c0_6 = arith.constant 0 : index
    %7 = vector.load %arg4[%c0_5, %c0_6] : memref<16x512xbf16, #tpu.memory_space<vmem>>, vector<16x512xbf16>
    tpu.vector_store %arg4[%c0_5, %c0_6], %6 {strides = array<i32>} : memref<16x512xbf16, #tpu.memory_space<vmem>>, vector<16x512xbf16>,
    return
  }
  func.func @transform_0(%arg0: i32) -> (i32, i32) {
    %c0_i32 = arith.constant 0 : i32
    %c0_i32_0 = arith.constant 0 : i32
    return %c0_i32, %arg0 : i32, i32
  }
  func.func @transform_1(%arg0: i32) -> (i32, i32) {
    %c0_i32 = arith.constant 0 : i32
    %c0_i32_0 = arith.constant 0 : i32
    %c0_i32_1 = arith.constant 0 : i32
    return %c0_i32, %c0_i32_0 : i32, i32
  }
  func.func @transform_2(%arg0: i32) -> (i32, i32) {
    %c0_i32 = arith.constant 0 : i32
    %c0_i32_0 = arith.constant 0 : i32
    %c0_i32_1 = arith.constant 0 : i32
    return %c0_i32, %c0_i32_0 : i32, i32
  }
  func.func @transform_3(%arg0: i32) -> (i32, i32) {
    %c0_i32 = arith.constant 0 : i32
    %c0_i32_0 = arith.constant 0 : i32
    return %c0_i32, %arg0 : i32, i32
  }
}

</mosaic_0001>

<llo_original>
// kernel: tpu_custom_call.1
$region0: #{tpu_custom_call.1}
  #allocation0 [shape = 'u32[]', space=smem, size = 0x4, offset = 0x4, fixed_abs, tag = 'smem constant byte address 0x4 - core index']
  #allocation1 [shape = 'u32[144,128]{1,0:T(1,128)}', space=vmem, size = 0x12000, scoped, tag = 'internal scratch']
  %s0 = inlined_call_operand.hbm [shape: bf16[72,1024], index: 0, kind: input, shape index: {}]
  %s1 = inlined_call_operand.vmem [shape: bf16[16,72], index: 1, kind: input, shape index: {}]
  %s2 = inlined_call_operand.vmem [shape: f32[16,1], index: 2, kind: input, shape index: {}]
  %s3 = inlined_call_operand.hbm [shape: bf16[16,1024], index: 3, kind: output, shape index: {}]
  %s4 = sld [smem:[#allocation0]]
  $region49: #{tpu_custom_call.1} parent=0
    _
  %s6 = ssub.s32 1, %s4
  %s7 = scalar_select 0, %s6, %s4
  $region1: #{tpu_custom_call.1} parent=0
    #allocation2 [shape = 'u8[147456]{0}', space=vmem, size = 0x24000, scoped, tag = 'input window, operand 0']
    #allocation3 [shape = 's32[2]{0}', space=sflag, size = 0x8, scoped, tag = 'scoped memory for tpu_custom_call.1']
    #allocation4 [shape = 's32[2]{0}', space=sflag, size = 0x8, scoped, tag = 'scoped memory for tpu_custom_call.1']
    #allocation5 [shape = 'u8[32768]{0}', space=vmem, size = 0x8000, scoped, tag = 'output window, operand 0']
    %8 = vsyncpa [#allocation3], 0
    %s9 = scalar_lea.sflag [#allocation3], 1
    %10 = vsyncpa %s9, 0
    %11 = vsyncpa [#allocation4], 0
    %s12 = scalar_lea.sflag [#allocation4], 1
    %13 = vsyncpa %s12, 0
    loop: start=0, step=1, limit=4
    $region2: #{tpu_custom_call.1} parent=1 // loop_pre_header
      _
    $region3: #{tpu_custom_call.1} parent=1 // loop_header
      %s15 = sphi 0, %s19
      %p16 = scmp.ge.s32.totalorder %s15, 4
      %s25 = sphi 0, %s27
      %s28 = sphi 0, %s25
      %s29 = sphi 0, %s28
      %s45 = sphi 0, %s29
      %s49 = sphi 0, %s49
      %s51 = sphi 0, %s49
      %s52 = sphi 0, %s51
      %s66 = sphi 0, %s52
      %s70 = sphi 0, %s70
      %s72 = sphi 0, %s70
      %s73 = sphi 0, %s72
      %s87 = sphi 0, %s73
      %s93 = sphi 0, %s95
      %s96 = sphi 0, %s93
      %s97 = sphi 0, %s96
      %s113 = sphi 0, %s97
    $region4: #{tpu_custom_call.1} parent=1 // loop_header_branch
      %18 = sbr.rel (%p16) target = $region8
    $region5: #{tpu_custom_call.1} parent=1 // loop_body
      %s20 = ssub.s32 %s15, 1
      %s21 = ssub.s32 %s15, 2
      %s22 = sadd.s32 %s15, 1
      %s23 = ssub.s32 %s15, %s22
      %p24 = scmp.eq.s32.totalorder %s23, 0
      %s26 = sadd.s32 %s25, 1
      %s27 = scalar_select %p24, %s25, %s26
      %p30 = pneg %p24
      %p31 = scmp.eq.s32.totalorder %s15, 1
      %p32 = por %p30, %p31
      %p33 = scmp.ne.s32.totalorder %s25, %s28
      %p34 = scmp.eq.s32.totalorder %s15, 0
      %p35 = por %p33, %p34
      %p36 = scmp.ne.s32.totalorder %s25, %s28
      %p37 = scmp.eq.s32.totalorder %s20, 1
      %p38 = por %p36, %p37
      %p39 = scmp.ne.s32.totalorder %s28, %s29
      %p40 = scmp.eq.s32.totalorder %s20, 0
      %p41 = por %p39, %p40
      %p42 = scmp.ne.s32.totalorder %s28, %s29
      %p43 = scmp.eq.s32.totalorder %s21, 1
      %p44 = por %p42, %p43
      %p46 = scmp.ne.s32.totalorder %s29, %s45
      %p47 = scmp.eq.s32.totalorder %s21, 0
      %p48 = por %p46, %p47
      %s50 = sadd.s32 %s49, 1
      %p53 = scmp.eq.s32.totalorder %s15, 1
      %p54 = scmp.ne.s32.totalorder %s49, %s51
      %p55 = scmp.eq.s32.totalorder %s15, 0
      %p56 = por %p54, %p55
      %p57 = scmp.ne.s32.totalorder %s49, %s51
      %p58 = scmp.eq.s32.totalorder %s20, 1
      %p59 = por %p57, %p58
      %p60 = scmp.ne.s32.totalorder %s51, %s52
      %p61 = scmp.eq.s32.totalorder %s20, 0
      %p62 = por %p60, %p61
      %p63 = scmp.ne.s32.totalorder %s51, %s52
      %p64 = scmp.eq.s32.totalorder %s21, 1
      %p65 = por %p63, %p64
      %p67 = scmp.ne.s32.totalorder %s52, %s66
      %p68 = scmp.eq.s32.totalorder %s21, 0
      %p69 = por %p67, %p68
      %s71 = sadd.s32 %s70, 1
      %p74 = scmp.eq.s32.totalorder %s15, 1
      %p75 = scmp.ne.s32.totalorder %s70, %s72
      %p76 = scmp.eq.s32.totalorder %s15, 0
      %p77 = por %p75, %p76
      %p78 = scmp.ne.s32.totalorder %s70, %s72
      %p79 = scmp.eq.s32.totalorder %s20, 1
      %p80 = por %p78, %p79
      %p81 = scmp.ne.s32.totalorder %s72, %s73
      %p82 = scmp.eq.s32.totalorder %s20, 0
      %p83 = por %p81, %p82
      %p84 = scmp.ne.s32.totalorder %s72, %s73
      %p85 = scmp.eq.s32.totalorder %s21, 1
      %p86 = por %p84, %p85
      %p88 = scmp.ne.s32.totalorder %s73, %s87
      %p89 = scmp.eq.s32.totalorder %s21, 0
      %p90 = por %p88, %p89
      %s91 = ssub.s32 %s15, %s22
      %p92 = scmp.eq.s32.totalorder %s91, 0
      %s94 = sadd.s32 %s93, 1
      %s95 = scalar_select %p92, %s93, %s94
      %p98 = pneg %p92
      %p99 = scmp.eq.s32.totalorder %s15, 1
      %p100 = por %p98, %p99
      %p101 = scmp.ne.s32.totalorder %s93, %s96
      %p102 = scmp.eq.s32.totalorder %s15, 0
      %p103 = por %p101, %p102
      %p104 = scmp.ne.s32.totalorder %s93, %s96
      %p105 = scmp.eq.s32.totalorder %s20, 1
      %p106 = por %p104, %p105
      %p107 = scmp.ne.s32.totalorder %s96, %s97
      %p108 = scmp.eq.s32.totalorder %s20, 0
      %p109 = por %p107, %p108
      %p110 = scmp.ne.s32.totalorder %s96, %s97
      %p111 = scmp.eq.s32.totalorder %s21, 1
      %p112 = por %p110, %p111
      %p114 = scmp.ne.s32.totalorder %s97, %s113
      %p115 = scmp.eq.s32.totalorder %s21, 0
      %p116 = por %p114, %p115
      %p117 = scmp.le.s32.totalorder 1, %s15
      %p118 = scmp.lt.s32.totalorder %s15, 3
      %p119 = pnand %p117, %p118
      %p120 = pneg %p119
      // Predicated region
      $region9: #{tpu_custom_call.1} parent=5 // pred_check
        _
      $region10: #{tpu_custom_call.1} parent=5 // pred_check_branch
        %122 = sbr.rel (%p119) target = $region12
      $region11: #{tpu_custom_call.1} parent=5 // pred_region
        %s123 = ssub.s32 %s15, 1
        // Predicated region
        $region13: #{tpu_custom_call.1} parent=11 // pred_check
          %p124 = pneg %p62
        $region14: #{tpu_custom_call.1} parent=11 // pred_check_branch
          %126 = sbr.rel (%p124) target = $region16
        $region15: #{tpu_custom_call.1} parent=11 // pred_region
          _
        $region16: #{tpu_custom_call.1} parent=11 // pred_fallthru
          _
        // Predicated region
        $region17: #{tpu_custom_call.1} parent=11 // pred_check
          %p127 = pneg %p83
        $region18: #{tpu_custom_call.1} parent=11 // pred_check_branch
          %129 = sbr.rel (%p127) target = $region20
        $region19: #{tpu_custom_call.1} parent=11 // pred_region
          _
        $region20: #{tpu_custom_call.1} parent=11 // pred_fallthru
          _
      $region12: #{tpu_custom_call.1} parent=5 // pred_fallthru
        _
      %p130 = scmp.lt.s32.totalorder %s15, 2
      // Predicated region
      $region21: #{tpu_custom_call.1} parent=5 // pred_check
        %p131 = pneg %p130
      $region22: #{tpu_custom_call.1} parent=5 // pred_check_branch
        %133 = sbr.rel (%p131) target = $region24
      $region23: #{tpu_custom_call.1} parent=5 // pred_region
        // Predicated region
        $region25: #{tpu_custom_call.1} parent=23 // pred_check
          %p134 = pneg %p35
        $region26: #{tpu_custom_call.1} parent=23 // pred_check_branch
          %136 = sbr.rel (%p134) target = $region28
        $region27: #{tpu_custom_call.1} parent=23 // pred_region
          %s137 = sand.u32 %s25, 1
          %s138 = scalar_lea.sflag [#allocation3], %s137
          %s139 = sand.u32 %s25, 1
          %s140 = smul.addr %s139, 144
          %s141 = scalar_lea.vmem [#allocation2], %s140
          %s142 = smul.u32 4, %s15
          %s144 = ssub.s32 2304, 2304
          %145 = vsyncadd %s138, %s144
          %s146 = smul.addr %s142, 64
          %s147 = scalar_lea.hbm %s0, %s146
          %s148 = sshll.u32 %s141, 4
          %s149 = int_to_ptr.vmem [resolvable:$true] %s148
          %154 = dma.hbm_to_vmem [thread:$0]  %s147, 2304, %s149, %s138, 512, 256, 16
        $region28: #{tpu_custom_call.1} parent=23 // pred_fallthru
          _
      $region24: #{tpu_custom_call.1} parent=5 // pred_fallthru
        _
      %p155 = scmp.le.s32.totalorder 1, %s15
      %p156 = scmp.lt.s32.totalorder %s15, 3
      %p157 = pnand %p155, %p156
      %p158 = pneg %p157
      // Predicated region
      $region29: #{tpu_custom_call.1} parent=5 // pred_check
        _
      $region30: #{tpu_custom_call.1} parent=5 // pred_check_branch
        %160 = sbr.rel (%p157) target = $region32
      $region31: #{tpu_custom_call.1} parent=5 // pred_region
        %s161 = ssub.s32 %s15, 1
        %s162 = sand.u32 %s28, 1
        %s163 = scalar_lea.sflag [#allocation3], %s162
        %s164 = sand.u32 %s28, 1
        %s165 = smul.addr %s164, 144
        %s166 = scalar_lea.vmem [#allocation2], %s165
        // Predicated region
        $region33: #{tpu_custom_call.1} parent=31 // pred_check
          %p167 = pneg %p41
        $region34: #{tpu_custom_call.1} parent=31 // pred_check_branch
          %169 = sbr.rel (%p167) target = $region36
        $region35: #{tpu_custom_call.1} parent=31 // pred_region
          %170 = dma.done %s163, 2304
        $region36: #{tpu_custom_call.1} parent=31 // pred_fallthru
          _
        %s171 = sand.u32 %s28, 1
        %s172 = scalar_lea.sflag [#allocation3], %s171
        %s173 = sand.u32 %s28, 1
        %s174 = smul.addr %s173, 144
        %s175 = scalar_lea.vmem [#allocation2], %s174
        %p176 = pneg %p41
        %p177 = pneg %p38
        %p178 = pneg %p62
        %p179 = pneg %p59
        %p180 = pneg %p83
        %p181 = pneg %p80
        %p182 = pneg %p109
        %p183 = pneg %p106
        %s184 = sand.u32 %s96, 1
        %s185 = scalar_lea.sflag [#allocation4], %s184
        %s186 = sand.u32 %s96, 1
        %s187 = smul.addr %s186, 32
        %s188 = scalar_lea.vmem [#allocation5], %s187
        %s189 = smul.u32 4, %s20
        %s190 = smul.u32 4, %s20
        %v192 = vld [vmem:[%s1] sm:$0xf]
        %v193 = vld [vmem:[%s1 + $0x4] sm:$0xf]
        %v194 = vld [vmem:[%s166] sm:$0xff]
        %v195 = vld [vmem:[%s166 + $0x8] sm:$0xff]
        %v196 = vld [vmem:[%s166 + $0x10] sm:$0xff]
        %v197 = vld [vmem:[%s166 + $0x18] sm:$0xff]
        %v198 = vld [vmem:[%s166 + $0x20] sm:$0xff]
        %v199 = vld [vmem:[%s166 + $0x28] sm:$0xff]
        %v200 = vld [vmem:[%s166 + $0x30] sm:$0xff]
        %v201 = vld [vmem:[%s166 + $0x38] sm:$0xff]
        %v202 = vld [vmem:[%s166 + $0x40] sm:$0xff]
        %v203 = vld [vmem:[%s166 + $0x48] sm:$0xff]
        %v204 = vld [vmem:[%s166 + $0x50] sm:$0xff]
        %v205 = vld [vmem:[%s166 + $0x58] sm:$0xff]
        %v206 = vld [vmem:[%s166 + $0x60] sm:$0xff]
        %v207 = vld [vmem:[%s166 + $0x68] sm:$0xff]
        %v208 = vld [vmem:[%s166 + $0x70] sm:$0xff]
        %v209 = vld [vmem:[%s166 + $0x78] sm:$0xff]
        %v210 = vld [vmem:[%s166 + $0x80] sm:$0xff]
        %v211 = vld [vmem:[%s166 + $0x88] sm:$0xff]
        %v212 = vld [vmem:[%s2] sm:$0xff]
        %v213 = vld [vmem:[%s2 + $0x8] sm:$0xff]
        %215 = vset.pattern.permute.xlu0 0
        %216 = vperm.xlu0 %215, %v212
        %v217 = vpop.permute.xlu0 %216
        %220 = vset.pattern.permute.xlu0 0
        %221 = vperm.xlu0 %220, %v213
        %v222 = vpop.permute.xlu0 %221
        %v226 = vunpack.c.l.b16 %v192
        %v227 = vunpack.c.l.b16 %v193
        %v228 = vpack.c.b16 %v227, %v226
        %v247 = vunpack.c.l.b16 %v194
        %v248 = vunpack.c.h.b16 %v194
        %v249 = vunpack.c.l.b16 %v195
        %v250 = vunpack.c.h.b16 %v195
        %v251 = vunpack.c.l.b16 %v196
        %v252 = vunpack.c.h.b16 %v196
        %v253 = vunpack.c.l.b16 %v197
        %v254 = vunpack.c.h.b16 %v197
        %v255 = vunpack.c.l.b16 %v198
        %v256 = vunpack.c.h.b16 %v198
        %v257 = vunpack.c.l.b16 %v199
        %v258 = vunpack.c.h.b16 %v199
        %v259 = vunpack.c.l.b16 %v200
        %v260 = vunpack.c.h.b16 %v200
        %v261 = vunpack.c.l.b16 %v201
        %v262 = vunpack.c.h.b16 %v201
        %v263 = vunpack.c.l.b16 %v202
        %v264 = vunpack.c.h.b16 %v202
        %v265 = vunpack.c.l.b16 %v203
        %v266 = vunpack.c.h.b16 %v203
        %v267 = vunpack.c.l.b16 %v204
        %v268 = vunpack.c.h.b16 %v204
        %v269 = vunpack.c.l.b16 %v205
        %v270 = vunpack.c.h.b16 %v205
        %v271 = vunpack.c.l.b16 %v206
        %v272 = vunpack.c.h.b16 %v206
        %v273 = vunpack.c.l.b16 %v207
        %v274 = vunpack.c.h.b16 %v207
        %v275 = vunpack.c.l.b16 %v208
        %v276 = vunpack.c.h.b16 %v208
        %v277 = vunpack.c.l.b16 %v209
        %v278 = vunpack.c.h.b16 %v209
        %v279 = vunpack.c.l.b16 %v210
        %v280 = vunpack.c.h.b16 %v210
        %v281 = vunpack.c.l.b16 %v211
        %v282 = vunpack.c.h.b16 %v211
        %v283 = vpack.c.b16 %v251, %v247
        %v284 = vpack.c.b16 %v252, %v248
        %v285 = vpack.c.b16 %v253, %v249
        %v286 = vpack.c.b16 %v254, %v250
        %v287 = vpack.c.b16 %v259, %v255
        %v288 = vpack.c.b16 %v260, %v256
        %v289 = vpack.c.b16 %v261, %v257
        %v290 = vpack.c.b16 %v262, %v258
        %v291 = vpack.c.b16 %v267, %v263
        %v292 = vpack.c.b16 %v268, %v264
        %v293 = vpack.c.b16 %v269, %v265
        %v294 = vpack.c.b16 %v270, %v266
        %v295 = vpack.c.b16 %v275, %v271
        %v296 = vpack.c.b16 %v276, %v272
        %v297 = vpack.c.b16 %v277, %v273
        %v298 = vpack.c.b16 %v278, %v274
        %v299 = vpack.c.b16 %v279, %v279
        %v300 = vpack.c.b16 %v280, %v280
        %v301 = vpack.c.b16 %v281, %v281
        %v302 = vpack.c.b16 %v282, %v282
        %vm319 = vcmask 588800
        %v321 = vsel %vm319, %v228, 0
        %vm323 = vcmask 1043456
        %v325 = vsel %vm323, %v299, 0
        %v328 = vsel %vm323, %v300, 0
        %v331 = vsel %vm323, %v301, 0
        %v334 = vsel %vm323, %v302, 0
        %336 = vmatprep.subr.bf16.mxu0 %v284
        %337 = vmatpush1.bf16.msra.mxu0 %v283
        %338 = vmatprep.subr.bf16.mxu0 %v288
        %339 = vmatpush1.bf16.msra.mxu0 %v287
        %340 = vmatprep.subr.bf16.mxu0 %v292
        %341 = vmatpush1.bf16.msra.mxu0 %v291
        %342 = vmatprep.subr.bf16.mxu0 %v296
        %343 = vmatpush1.bf16.msra.mxu0 %v295
        %344 = vmatprep.subr.bf16.mxu0 %v328
        %345 = vmatpush1.bf16.msra.mxu0 %v325
        %346 = vmatprep.subr.bf16.mxu0 0
        %347 = vmatpush1.bf16.msra.mxu0 0
        %348 = vmatprep.subr.bf16.mxu0 0
        %349 = vmatpush1.bf16.msra.mxu0 0
        %350 = vmatprep.subr.bf16.mxu0 0
        %351 = vmatpush1.bf16.msra.mxu0 0
        %352 = vmatprep.subr.bf16.mxu0 0
        %353 = vmatpush1.bf16.msra.mxu0 0
        %354 = vmatprep.subr.bf16.mxu0 0
        %355 = vmatpush1.bf16.msra.mxu0 0
        %356 = vmatprep.subr.bf16.mxu0 0
        %357 = vmatpush1.bf16.msra.mxu0 0
        %358 = vmatprep.subr.bf16.mxu0 0
        %359 = vmatpush1.bf16.msra.mxu0 0
        %360 = vmatprep.subr.bf16.mxu0 0
        %361 = vmatpush1.bf16.msra.mxu0 0
        %362 = vmatprep.subr.bf16.mxu0 0
        %363 = vmatpush1.bf16.msra.mxu0 0
        %364 = vmatprep.subr.bf16.mxu0 0
        %365 = vmatpush1.bf16.msra.mxu0 0
        %366 = vmatprep.subr.bf16.mxu0 0
        %367 = vmatpush1.bf16.msra.mxu0 0
        %368 = vmatprep.mubr.bf16.mxu0 0
        %369 = vmatmul.mubr.bf16.gmra.mrb[0].mxu0 %v321
        %v370 = vpop.f32.mrb[0].mxu0
        %v371 = vadd.f32 %v217, %v370
        %v372 = vpop.f32.mrb[0].mxu0
        %v373 = vadd.f32 %v217, %v372
        %v374 = vpop.f32.mrb[0].mxu0
        %v375 = vadd.f32 %v222, %v374
        %v376 = vpop.f32.mrb[0].mxu0
        %v377 = vadd.f32 %v222, %v376
        %378 = vdwg.mxu0
        %379 = vmatprep.subr.bf16.mxu0 %v286
        %380 = vmatpush1.bf16.msra.mxu0 %v285
        %381 = vmatprep.subr.bf16.mxu0 %v290
        %382 = vmatpush1.bf16.msra.mxu0 %v289
        %383 = vmatprep.subr.bf16.mxu0 %v294
        %384 = vmatpush1.bf16.msra.mxu0 %v293
        %385 = vmatprep.subr.bf16.mxu0 %v298
        %386 = vmatpush1.bf16.msra.mxu0 %v297
        %387 = vmatprep.subr.bf16.mxu0 %v334
        %388 = vmatpush1.bf16.msra.mxu0 %v331
        %389 = vmatprep.subr.bf16.mxu0 0
        %390 = vmatpush1.bf16.msra.mxu0 0
        %391 = vmatprep.subr.bf16.mxu0 0
        %392 = vmatpush1.bf16.msra.mxu0 0
        %393 = vmatprep.subr.bf16.mxu0 0
        %394 = vmatpush1.bf16.msra.mxu0 0
        %395 = vmatprep.subr.bf16.mxu0 0
        %396 = vmatpush1.bf16.msra.mxu0 0
        %397 = vmatprep.subr.bf16.mxu0 0
        %398 = vmatpush1.bf16.msra.mxu0 0
        %399 = vmatprep.subr.bf16.mxu0 0
        %400 = vmatpush1.bf16.msra.mxu0 0
        %401 = vmatprep.subr.bf16.mxu0 0
        %402 = vmatpush1.bf16.msra.mxu0 0
        %403 = vmatprep.subr.bf16.mxu0 0
        %404 = vmatpush1.bf16.msra.mxu0 0
        %405 = vmatprep.subr.bf16.mxu0 0
        %406 = vmatpush1.bf16.msra.mxu0 0
        %407 = vmatprep.subr.bf16.mxu0 0
        %408 = vmatpush1.bf16.msra.mxu0 0
        %409 = vmatprep.subr.bf16.mxu0 0
        %410 = vmatpush1.bf16.msra.mxu0 0
        %411 = vmatprep.mubr.bf16.mxu0 0
        %412 = vmatmul.mubr.bf16.gmra.mrb[0].mxu0 %v321
        %v413 = vpop.f32.mrb[0].mxu0
        %v414 = vadd.f32 %v217, %v413
        %v415 = vpop.f32.mrb[0].mxu0
        %v416 = vadd.f32 %v217, %v415
        %v417 = vpop.f32.mrb[0].mxu0
        %v418 = vadd.f32 %v222, %v417
        %v419 = vpop.f32.mrb[0].mxu0
        %v420 = vadd.f32 %v222, %v419
        %421 = vdwg.mxu0
        %v422 = vpack.c.bf16 %v375, %v371
        %v423 = vpack.c.bf16 %v377, %v373
        %v424 = vpack.c.bf16 %v418, %v414
        %v425 = vpack.c.bf16 %v420, %v416
        %v430 = vunpack.c.l.b16 %v422
        %v431 = vunpack.c.l.b16 %v423
        %v432 = vunpack.c.l.b16 %v424
        %v433 = vunpack.c.l.b16 %v425
        %v434 = vunpack.c.h.b16 %v422
        %v435 = vunpack.c.h.b16 %v423
        %v436 = vunpack.c.h.b16 %v424
        %v437 = vunpack.c.h.b16 %v425
        %v438 = vpack.c.b16 %v431, %v430
        %v439 = vpack.c.b16 %v433, %v432
        %v440 = vpack.c.b16 %v435, %v434
        %v441 = vpack.c.b16 %v437, %v436
        %446 = vst [vmem:[%s188] sm:$0xff] %v438
        %447 = vst [vmem:[%s188 + $0x8] sm:$0xff] %v439
        %448 = vst [vmem:[%s188 + $0x10] sm:$0xff] %v440
        %449 = vst [vmem:[%s188 + $0x18] sm:$0xff] %v441
        %s450 = sand.u32 %s96, 1
        %s451 = scalar_lea.sflag [#allocation4], %s450
        %s452 = sand.u32 %s96, 1
        %s453 = smul.addr %s452, 32
        %s454 = scalar_lea.vmem [#allocation5], %s453
        // Predicated region
        $region37: #{tpu_custom_call.1} parent=31 // pred_check
          %p455 = pneg %p106
        $region38: #{tpu_custom_call.1} parent=31 // pred_check_branch
          %457 = sbr.rel (%p455) target = $region40
        $region39: #{tpu_custom_call.1} parent=31 // pred_region
          %s458 = smul.u32 4, %s20
          %s460 = ssub.s32 512, 512
          %461 = vsyncadd %s451, %s460
          %s462 = smul.addr %s458, 64
          %s463 = scalar_lea.hbm %s3, %s462
          %s464 = sshll.u32 %s454, 4
          %s465 = int_to_ptr.vmem [resolvable:$true] %s464
          %470 = dma.vmem_to_hbm [thread:$0]  %s465, 512, %s463, %s451, 256, 512, 16
        $region40: #{tpu_custom_call.1} parent=31 // pred_fallthru
          _
      $region32: #{tpu_custom_call.1} parent=5 // pred_fallthru
        _
      %p471 = scmp.le.s32.totalorder 2, %s15
      // Predicated region
      $region41: #{tpu_custom_call.1} parent=5 // pred_check
        %p472 = pneg %p471
      $region42: #{tpu_custom_call.1} parent=5 // pred_check_branch
        %474 = sbr.rel (%p472) target = $region44
      $region43: #{tpu_custom_call.1} parent=5 // pred_region
        %s475 = ssub.s32 %s15, 2
        // Predicated region
        $region45: #{tpu_custom_call.1} parent=43 // pred_check
          %p476 = pneg %p112
        $region46: #{tpu_custom_call.1} parent=43 // pred_check_branch
          %478 = sbr.rel (%p476) target = $region48
        $region47: #{tpu_custom_call.1} parent=43 // pred_region
          %s479 = sand.u32 %s97, 1
          %s480 = scalar_lea.sflag [#allocation4], %s479
          %s481 = sand.u32 %s97, 1
          %s482 = smul.addr %s481, 32
          %s483 = scalar_lea.vmem [#allocation5], %s482
          %484 = dma.done %s480, 512
        $region48: #{tpu_custom_call.1} parent=43 // pred_fallthru
          _
      $region44: #{tpu_custom_call.1} parent=5 // pred_fallthru
        _
    $region6: #{tpu_custom_call.1} parent=1 // loop_footer
      %s19 = sadd.s32 1, %s15
    $region7: #{tpu_custom_call.1} parent=1 // loop_footer_branch
      %14 = sbr.rel target = $region3
    $region8: #{tpu_custom_call.1} parent=1 // loop_exit
      _
    %485 = vsyncpa [#allocation3], 1
    %s486 = scalar_lea.sflag [#allocation3], 1
    %487 = vsyncpa %s486, 1
    %488 = vsyncpa [#allocation4], 1
    %s489 = scalar_lea.sflag [#allocation4], 1
    %490 = vsyncpa %s489, 1

</llo_original>
